<compile_context>
chip_gen: v7x
topology: tpu7x:2x2x1
jax: 0.10.0
libtpu: 0.0.40
codegen_flags: <defaults>
</compile_context>

<pallas_src>
import jax
import jax.numpy as jnp
from jax.experimental import pallas as pl
from jax.experimental.pallas import tpu as pltpu

HIDDEN = 128
_MIN_TILE = 128


def dqn_kernel(x_ref, w1_ref, b1_ref, w2_ref, b2_ref, w3_ref, b3_ref, o_ref):
    # One batch tile, fully fused in VMEM.
    x = x_ref[...].astype(jnp.bfloat16)  # cast in-kernel (no wrapper-side round trip)
    h1 = jnp.dot(x, w1_ref[...], preferred_element_type=jnp.float32) + b1_ref[...]
    h1 = jnp.maximum(h1, 0.0).astype(w2_ref.dtype)   # h1 dead after next dot
    h2 = jnp.dot(h1, w2_ref[...], preferred_element_type=jnp.float32) + b2_ref[...]
    h2 = jnp.maximum(h2, 0.0).astype(w3_ref.dtype)
    # Narrow f32 writeback (out_dim lanes): masked stores, but the kernel is
    # HBM-bound rather than slot-bound, so fewer write bytes wins.
    o_ref[...] = jnp.dot(h2, w3_ref[...], preferred_element_type=jnp.float32) + b3_ref[...]


def prepare_dqn_params(params):
    """One-time weight prep, hoisted out of the per-call path:
    bf16 weights for the MXU, f32 row-vector biases for the f32 epilogue."""
    w1, b1, w2, b2, w3, b3 = params
    to_bf = lambda w: w.astype(jnp.bfloat16)
    to_bias = lambda b: b.astype(jnp.float32).reshape(1, -1)
    return (to_bf(w1), to_bias(b1), to_bf(w2), to_bias(b2), to_bf(w3), to_bias(b3))


def dqn_forward(x, prepared_params, *, tb=512):
    """relu(x@W1+b1) -> relu(@W2+b2) -> @W3+b3, PyTorch semantics, f32 output."""
    w1b, b1f, w2b, b2f, w3b, b3f = prepared_params
    B, in_dim = x.shape
    out_dim = w3b.shape[1]

    # --- batch tiling ---
    b8 = ((B + 7) // 8) * 8                    # sublane alignment
    if b8 >= 2 * _MIN_TILE:
        # large batch: cap the tile at ceil(b8/2) so n_tiles >= 2 and both
        # v7x TensorCores get work (no-op cost on single-TC v5e/v6e).
        half = ((b8 + 15) // 16) * 8
        TB = min(tb, half)
    else:
        TB = min(tb, b8)                       # tiny batch: one small tile
    b_pad = ((B + TB - 1) // TB) * TB
    n_tiles = b_pad // TB

    xp = x if b_pad == B else jnp.pad(x, ((0, b_pad - B), (0, 0)))

    def resident(a):
        # Full-array block with constant index -> DMA'd once, stays in VMEM.
        return pl.BlockSpec(a.shape, lambda i: (0,) * a.ndim)

    flops = 2 * b_pad * (in_dim * HIDDEN + HIDDEN * HIDDEN + HIDDEN * out_dim)
    bytes_accessed = (
        xp.size * xp.dtype.itemsize
        + (w1b.size + w2b.size + w3b.size) * 2
        + (b1f.size + b2f.size + b3f.size) * 4
        + b_pad * out_dim * 4
    )

    out = pl.pallas_call(
        dqn_kernel,
        out_shape=jax.ShapeDtypeStruct((b_pad, out_dim), jnp.float32),
        grid=(n_tiles,),
        in_specs=[
            pl.BlockSpec((TB, in_dim), lambda i: (i, 0)),   # streamed activation tile
            resident(w1b), resident(b1f),
            resident(w2b), resident(b2f),
            resident(w3b), resident(b3f),
        ],
        out_specs=pl.BlockSpec((TB, out_dim), lambda i: (i, 0)),
        compiler_params=pltpu.CompilerParams(dimension_semantics=("parallel",)),
        cost_estimate=pl.CostEstimate(
            flops=flops, transcendentals=0, bytes_accessed=bytes_accessed),
    )(xp, w1b, b1f, w2b, b2f, w3b, b3f)

    return out[:B] if b_pad != B else out


def init_dqn_params(key, input_dim, output_dim, hidden=HIDDEN):
    # Mimics PyTorch's default U(-1/sqrt(fan_in), 1/sqrt(fan_in)) init.
    ks = jax.random.split(key, 6)

    def linear(kw, kb, fan_in, fan_out):
        bound = 1.0 / jnp.sqrt(jnp.float32(fan_in))
        w = jax.random.uniform(kw, (fan_in, fan_out), jnp.float32, -bound, bound)
        b = jax.random.uniform(kb, (1, fan_out), jnp.float32, -bound, bound)
        return w, b

    w1, b1 = linear(ks[0], ks[1], input_dim, hidden)
    w2, b2 = linear(ks[2], ks[3], hidden, hidden)
    w3, b3 = linear(ks[4], ks[5], hidden, output_dim)
    return (w1, b1, w2, b2, w3, b3)


def dqn_reference_f32(x, params):
    w1, b1, w2, b2, w3, b3 = params
    h1 = jnp.maximum(x @ w1 + b1, 0.0)
    h2 = jnp.maximum(h1 @ w2 + b2, 0.0)
    return h2 @ w3 + b3


def dqn_reference_bf16(x, params):
    # Mirrors the kernel's dtype pipeline (bf16 MXU inputs, f32 accumulation).
    w1, b1, w2, b2, w3, b3 = params
    bf = jnp.bfloat16
    h1 = jnp.dot(x.astype(bf), w1.astype(bf), preferred_element_type=jnp.float32) + b1
    h1 = jnp.maximum(h1, 0.0).astype(bf)
    h2 = jnp.dot(h1, w2.astype(bf), preferred_element_type=jnp.float32) + b2
    h2 = jnp.maximum(h2, 0.0).astype(bf)
    return jnp.dot(h2, w3.astype(bf), preferred_element_type=jnp.float32) + b3


if __name__ == "__main__":
    key = jax.random.PRNGKey(0)
    k_params, k_x1, k_x2 = jax.random.split(key, 3)

    input_dim, output_dim = 32, 4
    params = init_dqn_params(k_params, input_dim, output_dim)
    prepared = prepare_dqn_params(params)   # hoisted one-time weight prep

    fwd = jax.jit(lambda xx: dqn_forward(xx, prepared))

    # Small batch (single tile path).
    x_small = jax.random.normal(k_x1, (8, input_dim), jnp.float32)
    out_small = jax.block_until_ready(fwd(x_small))
    assert out_small.shape == (8, output_dim)
    assert jnp.allclose(out_small, dqn_reference_bf16(x_small, params), atol=2e-3, rtol=2e-3)
    assert jnp.allclose(out_small, dqn_reference_f32(x_small, params), atol=5e-2, rtol=5e-2)

    # Larger ragged batch (exercises padding + >=2 grid tiles for v7x sharding).
    x_big = jax.random.normal(k_x2, (300, input_dim), jnp.float32)
    out_big = jax.block_until_ready(fwd(x_big))
    assert out_big.shape == (300, output_dim)
    assert jnp.allclose(out_big, dqn_reference_bf16(x_big, params), atol=2e-3, rtol=2e-3)
    assert jnp.allclose(out_big, dqn_reference_f32(x_big, params), atol=5e-2, rtol=5e-2)

    print("KERNEL_OK")
</pallas_src>

<mosaic_0001>
module attributes {stable_mosaic.version = 11 : i64} {
  func.func @dqn_kernel(%arg0: i32, %arg1: memref<8x32xf32, #tpu.memory_space<vmem>>, %arg2: memref<32x128xbf16, #tpu.memory_space<vmem>>, %arg3: memref<1x128xf32, #tpu.memory_space<vmem>>, %arg4: memref<128x128xbf16, #tpu.memory_space<vmem>>, %arg5: memref<1x128xf32, #tpu.memory_space<vmem>>, %arg6: memref<128x4xbf16, #tpu.memory_space<vmem>>, %arg7: memref<1x4xf32, #tpu.memory_space<vmem>>, %arg8: memref<8x4xf32, #tpu.memory_space<vmem>>) attributes {dimension_semantics = [#tpu.dimension_semantics<parallel>], iteration_bounds = array<i64: 1>, scalar_prefetch = 0 : i64, scratch_operands = 0 : i64, tpu.core_type = #tpu.core_type<tc>, window_params = [{transform_indices = @transform_0, window_bounds = array<i64: 8, 32>}, {pipeline_mode = #tpu.pipeline_mode<synchronous>, transform_indices = @transform_1, window_bounds = array<i64: 32, 128>}, {pipeline_mode = #tpu.pipeline_mode<synchronous>, transform_indices = @transform_2, window_bounds = array<i64: 1, 128>}, {pipeline_mode = #tpu.pipeline_mode<synchronous>, transform_indices = @transform_3, window_bounds = array<i64: 128, 128>}, {pipeline_mode = #tpu.pipeline_mode<synchronous>, transform_indices = @transform_4, window_bounds = array<i64: 1, 128>}, {pipeline_mode = #tpu.pipeline_mode<synchronous>, transform_indices = @transform_5, window_bounds = array<i64: 128, 4>}, {pipeline_mode = #tpu.pipeline_mode<synchronous>, transform_indices = @transform_6, window_bounds = array<i64: 1, 4>}, {transform_indices = @transform_7, window_bounds = array<i64: 8, 4>}]} {
    %c0 = arith.constant 0 : index
    %c0_0 = arith.constant 0 : index
    %0 = vector.load %arg1[%c0, %c0_0] : memref<8x32xf32, #tpu.memory_space<vmem>>, vector<8x32xf32>
    %1 = arith.truncf %0 : vector<8x32xf32> to vector<8x32xbf16>
    %c0_1 = arith.constant 0 : index
    %c0_2 = arith.constant 0 : index
    %2 = vector.load %arg2[%c0_1, %c0_2] : memref<32x128xbf16, #tpu.memory_space<vmem>>, vector<32x128xbf16>
    %cst = arith.constant dense<0.000000e+00> : vector<8x128xf32>
    %3 = tpu.matmul %1, %2, %cst {dimension_numbers = #tpu.dot_dimension_numbers<[1], [0], [0], [1], [0, 0, 1, 1], [], []>} : vector<8x32xbf16>, vector<32x128xbf16>, vector<8x128xf32> -> vector<8x128xf32>
    %c0_3 = arith.constant 0 : index
    %c0_4 = arith.constant 0 : index
    %4 = vector.load %arg3[%c0_3, %c0_4] : memref<1x128xf32, #tpu.memory_space<vmem>>, vector<1x128xf32>
    %5 = vector.broadcast %4 : vector<1x128xf32> to vector<8x128xf32>
    %6 = arith.addf %3, %5 : vector<8x128xf32>
    %cst_5 = arith.constant 0.000000e+00 : f32
    %7 = vector.broadcast %cst_5 : f32 to vector<8x128xf32>
    %8 = arith.maximumf %6, %7 : vector<8x128xf32>
    %9 = arith.truncf %8 : vector<8x128xf32> to vector<8x128xbf16>
    %c0_6 = arith.constant 0 : index
    %c0_7 = arith.constant 0 : index
    %10 = vector.load %arg4[%c0_6, %c0_7] : memref<128x128xbf16, #tpu.memory_space<vmem>>, vector<128x128xbf16>
    %cst_8 = arith.constant dense<0.000000e+00> : vector<8x128xf32>
    %11 = tpu.matmul %9, %10, %cst_8 {dimension_numbers = #tpu.dot_dimension_numbers<[1], [0], [0], [1], [0, 0, 1, 1], [], []>} : vector<8x128xbf16>, vector<128x128xbf16>, vector<8x128xf32> -> vector<8x128xf32>
    %c0_9 = arith.constant 0 : index
    %c0_10 = arith.constant 0 : index
    %12 = vector.load %arg5[%c0_9, %c0_10] : memref<1x128xf32, #tpu.memory_space<vmem>>, vector<1x128xf32>
    %13 = vector.broadcast %12 : vector<1x128xf32> to vector<8x128xf32>
    %14 = arith.addf %11, %13 : vector<8x128xf32>
    %cst_11 = arith.constant 0.000000e+00 : f32
    %15 = vector.broadcast %cst_11 : f32 to vector<8x128xf32>
    %16 = arith.maximumf %14, %15 : vector<8x128xf32>
    %17 = arith.truncf %16 : vector<8x128xf32> to vector<8x128xbf16>
    %c0_12 = arith.constant 0 : index
    %c0_13 = arith.constant 0 : index
    %18 = vector.load %arg6[%c0_12, %c0_13] : memref<128x4xbf16, #tpu.memory_space<vmem>>, vector<128x4xbf16>
    %cst_14 = arith.constant dense<0.000000e+00> : vector<8x4xf32>
    %19 = tpu.matmul %17, %18, %cst_14 {dimension_numbers = #tpu.dot_dimension_numbers<[1], [0], [0], [1], [0, 0, 1, 1], [], []>} : vector<8x128xbf16>, vector<128x4xbf16>, vector<8x4xf32> -> vector<8x4xf32>
    %c0_15 = arith.constant 0 : index
    %c0_16 = arith.constant 0 : index
    %20 = vector.load %arg7[%c0_15, %c0_16] : memref<1x4xf32, #tpu.memory_space<vmem>>, vector<1x4xf32>
    %21 = vector.broadcast %20 : vector<1x4xf32> to vector<8x4xf32>
    %22 = arith.addf %19, %21 : vector<8x4xf32>
    %c0_17 = arith.constant 0 : index
    %c0_18 = arith.constant 0 : index
    %23 = vector.load %arg8[%c0_17, %c0_18] : memref<8x4xf32, #tpu.memory_space<vmem>>, vector<8x4xf32>
    tpu.vector_store %arg8[%c0_17, %c0_18], %22 {strides = array<i32>} : memref<8x4xf32, #tpu.memory_space<vmem>>, vector<8x4xf32>,
    return
  }
  func.func @transform_0(%arg0: i32) -> (i32, i32) {
    %c0_i32 = arith.constant 0 : i32
    %c0_i32_0 = arith.constant 0 : i32
    return %arg0, %c0_i32 : i32, i32
  }
  func.func @transform_1(%arg0: i32) -> (i32, i32) {
    %c0_i32 = arith.constant 0 : i32
    %c0_i32_0 = arith.constant 0 : i32
    %c0_i32_1 = arith.constant 0 : i32
    return %c0_i32, %c0_i32_0 : i32, i32
  }
  func.func @transform_2(%arg0: i32) -> (i32, i32) {
    %c0_i32 = arith.constant 0 : i32
    %c0_i32_0 = arith.constant 0 : i32
    %c0_i32_1 = arith.constant 0 : i32
    return %c0_i32, %c0_i32_0 : i32, i32
  }
  func.func @transform_3(%arg0: i32) -> (i32, i32) {
    %c0_i32 = arith.constant 0 : i32
    %c0_i32_0 = arith.constant 0 : i32
    %c0_i32_1 = arith.constant 0 : i32
    return %c0_i32, %c0_i32_0 : i32, i32
  }
  func.func @transform_4(%arg0: i32) -> (i32, i32) {
    %c0_i32 = arith.constant 0 : i32
    %c0_i32_0 = arith.constant 0 : i32
    %c0_i32_1 = arith.constant 0 : i32
    return %c0_i32, %c0_i32_0 : i32, i32
  }
  func.func @transform_5(%arg0: i32) -> (i32, i32) {
    %c0_i32 = arith.constant 0 : i32
    %c0_i32_0 = arith.constant 0 : i32
    %c0_i32_1 = arith.constant 0 : i32
    return %c0_i32, %c0_i32_0 : i32, i32
  }
  func.func @transform_6(%arg0: i32) -> (i32, i32) {
    %c0_i32 = arith.constant 0 : i32
    %c0_i32_0 = arith.constant 0 : i32
    %c0_i32_1 = arith.constant 0 : i32
    return %c0_i32, %c0_i32_0 : i32, i32
  }
  func.func @transform_7(%arg0: i32) -> (i32, i32) {
    %c0_i32 = arith.constant 0 : i32
    %c0_i32_0 = arith.constant 0 : i32
    return %arg0, %c0_i32 : i32, i32
  }
}

</mosaic_0001>

<llo_original>
// kernel: _lambda_.1
$region0: #{_lambda_.1}
  #allocation0 [shape = 'u32[]', space=smem, size = 0x4, offset = 0x4, fixed_abs, tag = 'smem constant byte address 0x4 - core index']
  #allocation1 [shape = 'u32[144,128]{1,0:T(1,128)}', space=vmem, size = 0x12000, scoped, tag = 'internal scratch']
  %s0 = inlined_call_operand.vmem [shape: f32[8,32], index: 0, kind: input, shape index: {}]
  %s1 = inlined_call_operand.vmem [shape: bf16[32,128], index: 1, kind: input, shape index: {}]
  %s2 = inlined_call_operand.hbm [shape: f32[1,128], index: 2, kind: input, shape index: {}]
  %s3 = inlined_call_operand.hbm [shape: bf16[128,128], index: 3, kind: input, shape index: {}]
  %s4 = inlined_call_operand.vmem [shape: f32[1,128], index: 4, kind: input, shape index: {}]
  %s5 = inlined_call_operand.hbm [shape: bf16[128,4], index: 5, kind: input, shape index: {}]
  %s6 = inlined_call_operand.vmem [shape: f32[1,4], index: 6, kind: input, shape index: {}]
  %s7 = inlined_call_operand.vmem [shape: f32[8,4], index: 7, kind: output, shape index: {}]
  %s8 = sld [smem:[#allocation0]]
  $region50: #{_lambda_.1} parent=0
    _
  %s10 = ssub.s32 1, %s8
  %s11 = scalar_select 0, %s10, %s8
  $region1: #{_lambda_.1} parent=0
    #allocation2 [shape = 'u8[512]{0}', space=vmem, size = 0x400, scoped, tag = 'input window, operand 2, single buffered']
    #allocation3 [shape = 's32[1]{0}', space=sflag, size = 0x4, scoped, tag = 'scoped memory for _lambda_.1']
    #allocation4 [shape = 'u8[32768]{0}', space=vmem, size = 0x8000, scoped, tag = 'input window, operand 3, single buffered']
    #allocation5 [shape = 's32[1]{0}', space=sflag, size = 0x4, scoped, tag = 'scoped memory for _lambda_.1']
    #allocation6 [shape = 'u8[32768]{0}', space=vmem, size = 0x8000, scoped, tag = 'input window, operand 5, single buffered']
    %12 = vsyncpa [#allocation3], 0
    %13 = vsyncpa [#allocation5], 0
    // Predicated region
    $region2: #{_lambda_.1} parent=1 // pred_check
      _
    $region3: #{_lambda_.1} parent=1 // pred_check_branch
      %15 = sbr.rel (0) target = $region5
    $region4: #{_lambda_.1} parent=1 // pred_region
      _
    $region5: #{_lambda_.1} parent=1 // pred_fallthru
      _
    // Predicated region
    $region6: #{_lambda_.1} parent=1 // pred_check
      _
    $region7: #{_lambda_.1} parent=1 // pred_check_branch
      %17 = sbr.rel (0) target = $region9
    $region8: #{_lambda_.1} parent=1 // pred_region
      _
    $region9: #{_lambda_.1} parent=1 // pred_fallthru
      _
    // Predicated region
    $region10: #{_lambda_.1} parent=1 // pred_check
      _
    $region11: #{_lambda_.1} parent=1 // pred_check_branch
      %19 = sbr.rel (0) target = $region13
    $region12: #{_lambda_.1} parent=1 // pred_region
      %s21 = ssub.s32 16, 16
      %22 = vsyncadd [#allocation3], %s21
      %s24 = sshll.u32 [#allocation2], 4
      %s25 = int_to_ptr.vmem [resolvable:$true] %s24
      %27 = dma.hbm_to_vmem [thread:$0]  %s2, 16, %s25, [#allocation3]
    $region13: #{_lambda_.1} parent=1 // pred_fallthru
      _
    // Predicated region
    $region14: #{_lambda_.1} parent=1 // pred_check
      _
    $region15: #{_lambda_.1} parent=1 // pred_check_branch
      %29 = sbr.rel (0) target = $region17
    $region16: #{_lambda_.1} parent=1 // pred_region
      %s31 = ssub.s32 1024, 1024
      %32 = vsyncadd [#allocation5], %s31
      %s33 = sshll.u32 [#allocation4], 4
      %s34 = int_to_ptr.vmem [resolvable:$true] %s33
      %39 = dma.hbm_to_vmem [thread:$0]  %s3, 1024, %s34, [#allocation5], 64, 64, 4
    $region17: #{_lambda_.1} parent=1 // pred_fallthru
      _
    // Predicated region
    $region18: #{_lambda_.1} parent=1 // pred_check
      _
    $region19: #{_lambda_.1} parent=1 // pred_check_branch
      %41 = sbr.rel (0) target = $region21
    $region20: #{_lambda_.1} parent=1 // pred_region
      _
    $region21: #{_lambda_.1} parent=1 // pred_fallthru
      _
    // Predicated region
    $region22: #{_lambda_.1} parent=1 // pred_check
      _
    $region23: #{_lambda_.1} parent=1 // pred_check_branch
      %43 = sbr.rel (0) target = $region25
    $region24: #{_lambda_.1} parent=1 // pred_region
      %s45 = ssub.s32 1024, 1024
      %46 = vsyncadd [#allocation5], %s45
      %s47 = sshll.u32 [#allocation6], 4
      %s48 = int_to_ptr.vmem [resolvable:$true] %s47
      %53 = dma.hbm_to_vmem [thread:$0]  %s5, 1024, %s48, [#allocation5], 64, 64, 4
    $region25: #{_lambda_.1} parent=1 // pred_fallthru
      _
    // Predicated region
    $region26: #{_lambda_.1} parent=1 // pred_check
      _
    $region27: #{_lambda_.1} parent=1 // pred_check_branch
      %55 = sbr.rel (0) target = $region29
    $region28: #{_lambda_.1} parent=1 // pred_region
      _
    $region29: #{_lambda_.1} parent=1 // pred_fallthru
      _
    // Predicated region
    $region30: #{_lambda_.1} parent=1 // pred_check
      _
    $region31: #{_lambda_.1} parent=1 // pred_check_branch
      %57 = sbr.rel (0) target = $region33
    $region32: #{_lambda_.1} parent=1 // pred_region
      %58 = dma.done [#allocation3], 16
    $region33: #{_lambda_.1} parent=1 // pred_fallthru
      _
    // Predicated region
    $region34: #{_lambda_.1} parent=1 // pred_check
      _
    $region35: #{_lambda_.1} parent=1 // pred_check_branch
      %60 = sbr.rel (0) target = $region37
    $region36: #{_lambda_.1} parent=1 // pred_region
      %61 = dma.done [#allocation5], 1024
    $region37: #{_lambda_.1} parent=1 // pred_fallthru
      _
    // Predicated region
    $region38: #{_lambda_.1} parent=1 // pred_check
      _
    $region39: #{_lambda_.1} parent=1 // pred_check_branch
      %63 = sbr.rel (0) target = $region41
    $region40: #{_lambda_.1} parent=1 // pred_region
      %64 = dma.done [#allocation5], 1024
    $region41: #{_lambda_.1} parent=1 // pred_fallthru
      _
    %v66 = vld [vmem:[%s0] sm:$0xff]
    %v67 = vpack.c.bf16 %v66, %v66
    %v68 = vld [vmem:[%s1] sm:$0xf]
    %v69 = vld [vmem:[%s1 + $0x4] sm:$0xf]
    %v70 = vld [vmem:[%s1 + $0x8] sm:$0xf]
    %v71 = vld [vmem:[%s1 + $0xc] sm:$0xf]
    %v72 = vld [vmem:[#allocation2] sm:$0x1]
    %v74 = vlaneseq
    %v75 = vshrl.u32 %v74, 7
    %v76 = vsub.s32 0, %v75
    %v77 = vrot.slane %v72, %v76
    %v83 = vunpack.c.l.b16 %v68
    %v84 = vunpack.c.l.b16 %v69
    %v85 = vunpack.c.l.b16 %v70
    %v86 = vunpack.c.l.b16 %v71
    %v87 = vpack.c.b16 %v84, %v83
    %v88 = vpack.c.b16 %v86, %v85
    %vm91 = vcmask 261120
    %v93 = vsel %vm91, %v67, 0
    %95 = vmatprep.subr.bf16.mxu0 0
    %96 = vmatpush1.bf16.msra.mxu0 %v87
    %97 = vmatprep.subr.bf16.mxu0 0
    %98 = vmatpush1.bf16.msra.mxu0 %v88
    %99 = vmatprep.subr.bf16.mxu0 0
    %100 = vmatpush1.bf16.msra.mxu0 0
    %101 = vmatprep.subr.bf16.mxu0 0
    %102 = vmatpush1.bf16.msra.mxu0 0
    %103 = vmatprep.subr.bf16.mxu0 0
    %104 = vmatpush1.bf16.msra.mxu0 0
    %105 = vmatprep.subr.bf16.mxu0 0
    %106 = vmatpush1.bf16.msra.mxu0 0
    %107 = vmatprep.subr.bf16.mxu0 0
    %108 = vmatpush1.bf16.msra.mxu0 0
    %109 = vmatprep.subr.bf16.mxu0 0
    %110 = vmatpush1.bf16.msra.mxu0 0
    %111 = vmatprep.subr.bf16.mxu0 0
    %112 = vmatpush1.bf16.msra.mxu0 0
    %113 = vmatprep.subr.bf16.mxu0 0
    %114 = vmatpush1.bf16.msra.mxu0 0
    %115 = vmatprep.subr.bf16.mxu0 0
    %116 = vmatpush1.bf16.msra.mxu0 0
    %117 = vmatprep.subr.bf16.mxu0 0
    %118 = vmatpush1.bf16.msra.mxu0 0
    %119 = vmatprep.subr.bf16.mxu0 0
    %120 = vmatpush1.bf16.msra.mxu0 0
    %121 = vmatprep.subr.bf16.mxu0 0
    %122 = vmatpush1.bf16.msra.mxu0 0
    %123 = vmatprep.subr.bf16.mxu0 0
    %124 = vmatpush1.bf16.msra.mxu0 0
    %125 = vmatprep.subr.bf16.mxu0 0
    %126 = vmatpush1.bf16.msra.mxu0 0
    %127 = vmatprep.mubr.bf16.mxu0 0
    %128 = vmatmul.mubr.bf16.gmra.mrb[0].mxu0 %v93
    %v129 = vpop.f32.mrb[0].mxu0
    %v130 = vadd.f32 %v77, %v129
    %v131 = vpop.f32.mrb[0].mxu0
    %v132 = vpop.f32.mrb[0].mxu0
    %v133 = vpop.f32.mrb[0].mxu0
    %134 = vdwg.mxu0
    %v135 = vmax.f32 %v130, 0.0
    %v136 = vpack.c.bf16 %v135, %v135
    %v137 = vld [vmem:[#allocation4] sm:$0xf]
    %v138 = vld [vmem:[#allocation4 + $0x4] sm:$0xf]
    %v139 = vld [vmem:[#allocation4 + $0x8] sm:$0xf]
    %v140 = vld [vmem:[#allocation4 + $0xc] sm:$0xf]
    %v141 = vld [vmem:[#allocation4 + $0x10] sm:$0xf]
    %v142 = vld [vmem:[#allocation4 + $0x14] sm:$0xf]
    %v143 = vld [vmem:[#allocation4 + $0x18] sm:$0xf]
    %v144 = vld [vmem:[#allocation4 + $0x1c] sm:$0xf]
    %v145 = vld [vmem:[#allocation4 + $0x20] sm:$0xf]
    %v146 = vld [vmem:[#allocation4 + $0x24] sm:$0xf]
    %v147 = vld [vmem:[#allocation4 + $0x28] sm:$0xf]
    %v148 = vld [vmem:[#allocation4 + $0x2c] sm:$0xf]
    %v149 = vld [vmem:[#allocation4 + $0x30] sm:$0xf]
    %v150 = vld [vmem:[#allocation4 + $0x34] sm:$0xf]
    %v151 = vld [vmem:[#allocation4 + $0x38] sm:$0xf]
    %v152 = vld [vmem:[#allocation4 + $0x3c] sm:$0xf]
    %v153 = vld [vmem:[%s4] sm:$0x1]
    %v155 = vlaneseq
    %v156 = vshrl.u32 %v155, 7
    %v157 = vsub.s32 0, %v156
    %v158 = vrot.slane %v153, %v157
    %v176 = vunpack.c.l.b16 %v137
    %v177 = vunpack.c.l.b16 %v138
    %v178 = vunpack.c.l.b16 %v139
    %v179 = vunpack.c.l.b16 %v140
    %v180 = vunpack.c.l.b16 %v141
    %v181 = vunpack.c.l.b16 %v142
    %v182 = vunpack.c.l.b16 %v143
    %v183 = vunpack.c.l.b16 %v144
    %v184 = vunpack.c.l.b16 %v145
    %v185 = vunpack.c.l.b16 %v146
    %v186 = vunpack.c.l.b16 %v147
    %v187 = vunpack.c.l.b16 %v148
    %v188 = vunpack.c.l.b16 %v149
    %v189 = vunpack.c.l.b16 %v150
    %v190 = vunpack.c.l.b16 %v151
    %v191 = vunpack.c.l.b16 %v152
    %v192 = vpack.c.b16 %v177, %v176
    %v193 = vpack.c.b16 %v179, %v178
    %v194 = vpack.c.b16 %v181, %v180
    %v195 = vpack.c.b16 %v183, %v182
    %v196 = vpack.c.b16 %v185, %v184
    %v197 = vpack.c.b16 %v187, %v186
    %v198 = vpack.c.b16 %v189, %v188
    %v199 = vpack.c.b16 %v191, %v190
    %208 = vmatprep.subr.bf16.mxu0 0
    %209 = vmatpush1.bf16.msra.mxu0 %v192
    %210 = vmatprep.subr.bf16.mxu0 0
    %211 = vmatpush1.bf16.msra.mxu0 %v193
    %212 = vmatprep.subr.bf16.mxu0 0
    %213 = vmatpush1.bf16.msra.mxu0 %v194
    %214 = vmatprep.subr.bf16.mxu0 0
    %215 = vmatpush1.bf16.msra.mxu0 %v195
    %216 = vmatprep.subr.bf16.mxu0 0
    %217 = vmatpush1.bf16.msra.mxu0 %v196
    %218 = vmatprep.subr.bf16.mxu0 0
    %219 = vmatpush1.bf16.msra.mxu0 %v197
    %220 = vmatprep.subr.bf16.mxu0 0
    %221 = vmatpush1.bf16.msra.mxu0 %v198
    %222 = vmatprep.subr.bf16.mxu0 0
    %223 = vmatpush1.bf16.msra.mxu0 %v199
    %224 = vmatprep.subr.bf16.mxu0 0
    %225 = vmatpush1.bf16.msra.mxu0 0
    %226 = vmatprep.subr.bf16.mxu0 0
    %227 = vmatpush1.bf16.msra.mxu0 0
    %228 = vmatprep.subr.bf16.mxu0 0
    %229 = vmatpush1.bf16.msra.mxu0 0
    %230 = vmatprep.subr.bf16.mxu0 0
    %231 = vmatpush1.bf16.msra.mxu0 0
    %232 = vmatprep.subr.bf16.mxu0 0
    %233 = vmatpush1.bf16.msra.mxu0 0
    %234 = vmatprep.subr.bf16.mxu0 0
    %235 = vmatpush1.bf16.msra.mxu0 0
    %236 = vmatprep.subr.bf16.mxu0 0
    %237 = vmatpush1.bf16.msra.mxu0 0
    %238 = vmatprep.subr.bf16.mxu0 0
    %239 = vmatpush1.bf16.msra.mxu0 0
    %240 = vmatprep.mubr.bf16.mxu0 0
    %241 = vmatmul.mubr.bf16.gmra.mrb[0].mxu0 %v136
    %v242 = vpop.f32.mrb[0].mxu0
    %v243 = vadd.f32 %v158, %v242
    %v244 = vpop.f32.mrb[0].mxu0
    %v245 = vpop.f32.mrb[0].mxu0
    %v246 = vpop.f32.mrb[0].mxu0
    %247 = vdwg.mxu0
    %v248 = vmax.f32 %v243, 0.0
    %v249 = vpack.c.bf16 %v248, %v248
    %v250 = vld [vmem:[#allocation6] sm:$0xf]
    %v251 = vld [vmem:[#allocation6 + $0x4] sm:$0xf]
    %v252 = vld [vmem:[#allocation6 + $0x8] sm:$0xf]
    %v253 = vld [vmem:[#allocation6 + $0xc] sm:$0xf]
    %v254 = vld [vmem:[#allocation6 + $0x10] sm:$0xf]
    %v255 = vld [vmem:[#allocation6 + $0x14] sm:$0xf]
    %v256 = vld [vmem:[#allocation6 + $0x18] sm:$0xf]
    %v257 = vld [vmem:[#allocation6 + $0x1c] sm:$0xf]
    %v258 = vld [vmem:[#allocation6 + $0x20] sm:$0xf]
    %v259 = vld [vmem:[#allocation6 + $0x24] sm:$0xf]
    %v260 = vld [vmem:[#allocation6 + $0x28] sm:$0xf]
    %v261 = vld [vmem:[#allocation6 + $0x2c] sm:$0xf]
    %v262 = vld [vmem:[#allocation6 + $0x30] sm:$0xf]
    %v263 = vld [vmem:[#allocation6 + $0x34] sm:$0xf]
    %v264 = vld [vmem:[#allocation6 + $0x38] sm:$0xf]
    %v265 = vld [vmem:[#allocation6 + $0x3c] sm:$0xf]
    %v266 = vld [vmem:[%s6] sm:$0x1]
    %v268 = vlaneseq
    %v269 = vshrl.u32 %v268, 7
    %v270 = vsub.s32 0, %v269
    %v271 = vrot.slane %v266, %v270
    %v289 = vunpack.c.l.b16 %v250
    %v290 = vunpack.c.l.b16 %v251
    %v291 = vunpack.c.l.b16 %v252
    %v292 = vunpack.c.l.b16 %v253
    %v293 = vunpack.c.l.b16 %v254
    %v294 = vunpack.c.l.b16 %v255
    %v295 = vunpack.c.l.b16 %v256
    %v296 = vunpack.c.l.b16 %v257
    %v297 = vunpack.c.l.b16 %v258
    %v298 = vunpack.c.l.b16 %v259
    %v299 = vunpack.c.l.b16 %v260
    %v300 = vunpack.c.l.b16 %v261
    %v301 = vunpack.c.l.b16 %v262
    %v302 = vunpack.c.l.b16 %v263
    %v303 = vunpack.c.l.b16 %v264
    %v304 = vunpack.c.l.b16 %v265
    %v305 = vpack.c.b16 %v290, %v289
    %v306 = vpack.c.b16 %v292, %v291
    %v307 = vpack.c.b16 %v294, %v293
    %v308 = vpack.c.b16 %v296, %v295
    %v309 = vpack.c.b16 %v298, %v297
    %v310 = vpack.c.b16 %v300, %v299
    %v311 = vpack.c.b16 %v302, %v301
    %v312 = vpack.c.b16 %v304, %v303
    %321 = vmatprep.subr.bf16.mxu0 0
    %322 = vmatpush1.bf16.msra.mxu0 %v305
    %323 = vmatprep.subr.bf16.mxu0 0
    %324 = vmatpush1.bf16.msra.mxu0 %v306
    %325 = vmatprep.subr.bf16.mxu0 0
    %326 = vmatpush1.bf16.msra.mxu0 %v307
    %327 = vmatprep.subr.bf16.mxu0 0
    %328 = vmatpush1.bf16.msra.mxu0 %v308
    %329 = vmatprep.subr.bf16.mxu0 0
    %330 = vmatpush1.bf16.msra.mxu0 %v309
    %331 = vmatprep.subr.bf16.mxu0 0
    %332 = vmatpush1.bf16.msra.mxu0 %v310
    %333 = vmatprep.subr.bf16.mxu0 0
    %334 = vmatpush1.bf16.msra.mxu0 %v311
    %335 = vmatprep.subr.bf16.mxu0 0
    %336 = vmatpush1.bf16.msra.mxu0 %v312
    %337 = vmatprep.subr.bf16.mxu0 0
    %338 = vmatpush1.bf16.msra.mxu0 0
    %339 = vmatprep.subr.bf16.mxu0 0
    %340 = vmatpush1.bf16.msra.mxu0 0
    %341 = vmatprep.subr.bf16.mxu0 0
    %342 = vmatpush1.bf16.msra.mxu0 0
    %343 = vmatprep.subr.bf16.mxu0 0
    %344 = vmatpush1.bf16.msra.mxu0 0
    %345 = vmatprep.subr.bf16.mxu0 0
    %346 = vmatpush1.bf16.msra.mxu0 0
    %347 = vmatprep.subr.bf16.mxu0 0
    %348 = vmatpush1.bf16.msra.mxu0 0
    %349 = vmatprep.subr.bf16.mxu0 0
    %350 = vmatpush1.bf16.msra.mxu0 0
    %351 = vmatprep.subr.bf16.mxu0 0
    %352 = vmatpush1.bf16.msra.mxu0 0
    %353 = vmatprep.mubr.bf16.mxu0 0
    %354 = vmatmul.mubr.bf16.gmra.mrb[0].mxu0 %v249
    %v355 = vpop.f32.mrb[0].mxu0
    %v356 = vadd.f32 %v271, %v355
    %v357 = vpop.f32.mrb[0].mxu0
    %v358 = vpop.f32.mrb[0].mxu0
    %v359 = vpop.f32.mrb[0].mxu0
    %360 = vdwg.mxu0
    %vm361 = vcmask 31744
    %362 = vst.msk [vmem:[%s7] sm:$0xff] %vm361, %v356
    // Predicated region
    $region42: #{_lambda_.1} parent=1 // pred_check
      _
    $region43: #{_lambda_.1} parent=1 // pred_check_branch
      %364 = sbr.rel (0) target = $region45
    $region44: #{_lambda_.1} parent=1 // pred_region
      _
    $region45: #{_lambda_.1} parent=1 // pred_fallthru
      _
    // Predicated region
    $region46: #{_lambda_.1} parent=1 // pred_check
      _
    $region47: #{_lambda_.1} parent=1 // pred_check_branch
      %366 = sbr.rel (0) target = $region49
    $region48: #{_lambda_.1} parent=1 // pred_region
      _
    $region49: #{_lambda_.1} parent=1 // pred_fallthru
      _
    %367 = vsyncpa [#allocation3], 1
    %368 = vsyncpa [#allocation5], 1

</llo_original>
